<compile_context>
chip_gen: v5e
topology: v5e:2x2
jax: 0.10.0
libtpu: 0.0.40
codegen_flags: <defaults>
</compile_context>

<pallas_src>
import functools

import jax
import jax.numpy as jnp
from jax.experimental import pallas as pl
from jax.experimental.pallas import tpu as pltpu


# ----------------------------------------------------------------------------
# Helpers
# ----------------------------------------------------------------------------
def _round_up(x, m):
    return ((x + m - 1) // m) * m


@functools.lru_cache(maxsize=None)
def _vmem_limit_bytes():
    """Generation-aware VMEM budget (v5e/v6e: 128 MiB, v7x: 64 MiB per TC)."""
    try:
        cap = int(pltpu.get_tpu_info().vmem_capacity_bytes)
    except Exception:
        cap = 64 << 20
    return int(min(96 << 20, (cap * 3) // 4))


# ----------------------------------------------------------------------------
# Pallas kernels
# ----------------------------------------------------------------------------
def _conv_bn_kernel(a_ref, b_ref, t_ref, o_ref, *, relu):
    """out = relu( (A @ B) + bias )  (BN scale pre-folded into B, ReLU opt.)"""
    acc = jnp.dot(a_ref[...], b_ref[...], preferred_element_type=jnp.float32)
    acc = acc + t_ref[...]
    if relu:
        acc = jnp.maximum(acc, 0.0)
    o_ref[...] = acc.astype(o_ref.dtype)


def _conv_bn_res_kernel(a_ref, b_ref, t_ref, r_ref, o_ref, *, relu):
    """out = relu( (A @ B) + bias + residual )."""
    acc = jnp.dot(a_ref[...], b_ref[...], preferred_element_type=jnp.float32)
    acc = acc + t_ref[...] + r_ref[...]
    if relu:
        acc = jnp.maximum(acc, 0.0)
    o_ref[...] = acc.astype(o_ref.dtype)


def _maxpool_kernel(p_ref, o_ref):
    """p_ref: (KK, tm, C) window patches -> max over the leading window axis."""
    m = p_ref[0]
    for j in range(1, p_ref.shape[0]):
        m = jnp.maximum(m, p_ref[j])
    o_ref[...] = m


def _avgpool_kernel(x_ref, o_ref):
    """x_ref: (N, HW, C) -> mean over the spatial axis (single XLU reduce)."""
    acc = jnp.sum(x_ref[...].astype(jnp.float32), axis=1)
    o_ref[...] = (acc / float(x_ref.shape[1])).astype(o_ref.dtype)


# ----------------------------------------------------------------------------
# Pallas wrappers
# ----------------------------------------------------------------------------
def conv_bn_matmul(patches, w_mat, bias, residual=None, relu=True):
    """patches: (M, K) f32, w_mat: (K, C) f32 (BN scale folded), bias: (C,)."""
    M, K = patches.shape
    Kb, C = w_mat.shape
    assert K == Kb

    # Lane-align K and pad rows to a multiple of the row tile for pipelining.
    Kp = _round_up(K, 128)
    tm = min(256, _round_up(M, 8))
    Mp = _round_up(M, tm)

    a = patches
    if Kp != K:
        a = jnp.pad(a, ((0, 0), (0, Kp - K)))
    if Mp != M:
        a = jnp.pad(a, ((0, Mp - M), (0, 0)))
    a = a.astype(jnp.bfloat16)  # bf16 MXU operands, f32 accumulate

    b = w_mat
    if Kp != K:
        b = jnp.pad(b, ((0, Kp - K), (0, 0)))
    b = b.astype(jnp.bfloat16)

    t = bias.reshape(1, C).astype(jnp.float32)

    grid = (Mp // tm,)
    compiler_params = pltpu.CompilerParams(
        dimension_semantics=("parallel",),
        vmem_limit_bytes=_vmem_limit_bytes(),
    )
    cost = pl.CostEstimate(
        flops=2 * Mp * Kp * C,
        transcendentals=0,
        bytes_accessed=(Mp * Kp * 2 + Kp * C * 2 + C * 4 + Mp * C * 4
                        + (Mp * C * 4 if residual is not None else 0)),
    )

    if residual is None:
        kernel = functools.partial(_conv_bn_kernel, relu=relu)
        out = pl.pallas_call(
            kernel,
            out_shape=jax.ShapeDtypeStruct((Mp, C), jnp.float32),
            grid=grid,
            in_specs=[
                pl.BlockSpec((tm, Kp), lambda i: (i, 0)),
                pl.BlockSpec((Kp, C), lambda i: (0, 0)),
                pl.BlockSpec((1, C), lambda i: (0, 0)),
            ],
            out_specs=pl.BlockSpec((tm, C), lambda i: (i, 0)),
            compiler_params=compiler_params,
            cost_estimate=cost,
        )(a, b, t)
    else:
        r = residual
        if Mp != M:
            r = jnp.pad(r, ((0, Mp - M), (0, 0)))
        r = r.astype(jnp.float32)
        kernel = functools.partial(_conv_bn_res_kernel, relu=relu)
        out = pl.pallas_call(
            kernel,
            out_shape=jax.ShapeDtypeStruct((Mp, C), jnp.float32),
            grid=grid,
            in_specs=[
                pl.BlockSpec((tm, Kp), lambda i: (i, 0)),
                pl.BlockSpec((Kp, C), lambda i: (0, 0)),
                pl.BlockSpec((1, C), lambda i: (0, 0)),
                pl.BlockSpec((tm, C), lambda i: (i, 0)),
            ],
            out_specs=pl.BlockSpec((tm, C), lambda i: (i, 0)),
            compiler_params=compiler_params,
            cost_estimate=cost,
        )(a, b, t, r)

    return out[:M] if Mp != M else out


def extract_patches(x, kh, kw, stride, pad, pad_value=0.0):
    """x: NHWC -> (N*OH*OW, kh*kw*C) ordered (kh, kw, c) along K. Pure glue."""
    N, H, W, C = x.shape
    xp = jnp.pad(x, ((0, 0), (pad, pad), (pad, pad), (0, 0)),
                 constant_values=pad_value)
    OH = (H + 2 * pad - kh) // stride + 1
    OW = (W + 2 * pad - kw) // stride + 1
    cols = []
    for i in range(kh):
        for j in range(kw):
            cols.append(xp[:, i:i + stride * OH:stride,
                           j:j + stride * OW:stride, :])
    patches = jnp.concatenate(cols, axis=-1)  # (N, OH, OW, kh*kw*C)
    return patches.reshape(N * OH * OW, kh * kw * C), (N, OH, OW)


def conv_bn(x, w, bn, stride, pad, residual=None, relu=True):
    """x: NHWC, w: (Cout, Cin, KH, KW) (PyTorch OIHW). Frozen-BN folded in."""
    Cout, Cin, KH, KW = w.shape
    patches, (N, OH, OW) = extract_patches(x, KH, KW, stride, pad)
    gamma, beta, mean, var = bn
    scale = gamma / jnp.sqrt(var + 1e-5)
    bias = beta - mean * scale
    # Fold the frozen-BN scale into the (K, Cout) weight matrix (one-time glue).
    w_mat = jnp.transpose(w, (2, 3, 1, 0)).reshape(KH * KW * Cin, Cout)
    w_mat = w_mat * scale[None, :]
    res_flat = None if residual is None else residual.reshape(N * OH * OW, Cout)
    out = conv_bn_matmul(patches, w_mat, bias, res_flat, relu)
    return out.reshape(N, OH, OW, Cout)


def maxpool_3x3_s2_p1(x):
    N, H, W, C = x.shape
    k, stride, pad = 3, 2, 1
    neg = jnp.finfo(x.dtype).min
    xp = jnp.pad(x, ((0, 0), (pad, pad), (pad, pad), (0, 0)),
                 constant_values=neg)
    OH = (H + 2 * pad - k) // stride + 1
    OW = (W + 2 * pad - k) // stride + 1
    cols = []
    for i in range(k):
        for j in range(k):
            cols.append(xp[:, i:i + stride * OH:stride,
                           j:j + stride * OW:stride, :])
    M = N * OH * OW
    # (KK, M, C): window index on the leading axis -> cheap leading-axis reads.
    patches = jnp.stack(cols, axis=0).reshape(k * k, M, C)
    tm = min(256, _round_up(M, 8))
    Mp = _round_up(M, tm)
    if Mp != M:
        patches = jnp.pad(patches, ((0, 0), (0, Mp - M), (0, 0)),
                          constant_values=neg)
    out = pl.pallas_call(
        _maxpool_kernel,
        out_shape=jax.ShapeDtypeStruct((Mp, C), x.dtype),
        grid=(Mp // tm,),
        in_specs=[pl.BlockSpec((k * k, tm, C), lambda i: (0, i, 0))],
        out_specs=pl.BlockSpec((tm, C), lambda i: (i, 0)),
        compiler_params=pltpu.CompilerParams(
            dimension_semantics=("parallel",),
            vmem_limit_bytes=_vmem_limit_bytes(),
        ),
    )(patches)
    out = out[:M] if Mp != M else out
    return out.reshape(N, OH, OW, C)


def global_avgpool(x):
    N, H, W, C = x.shape
    xf = x.reshape(N, H * W, C)
    return pl.pallas_call(
        _avgpool_kernel,
        out_shape=jax.ShapeDtypeStruct((N, C), x.dtype),
        grid=(1,),
        in_specs=[pl.BlockSpec((N, H * W, C), lambda i: (0, 0, 0))],
        out_specs=pl.BlockSpec((N, C), lambda i: (0, 0)),
        compiler_params=pltpu.CompilerParams(
            vmem_limit_bytes=_vmem_limit_bytes(),
        ),
    )(xf)


# ----------------------------------------------------------------------------
# Deterministic parameter init (synthetic, matches torchvision resnet18 shapes)
# ----------------------------------------------------------------------------
def init_conv(key, cout, cin, k):
    fan_in = cin * k * k
    std = (2.0 / fan_in) ** 0.5
    return std * jax.random.normal(key, (cout, cin, k, k), jnp.float32)


def init_bn(key, c):
    k1, k2, k3, k4 = jax.random.split(key, 4)
    gamma = 1.0 + 0.1 * jax.random.normal(k1, (c,), jnp.float32)
    beta = 0.1 * jax.random.normal(k2, (c,), jnp.float32)
    mean = 0.1 * jax.random.normal(k3, (c,), jnp.float32)
    var = 1.0 + 0.1 * jax.random.uniform(k4, (c,), jnp.float32)
    return gamma, beta, mean, var


def init_resnet18(key, nc):
    keys = iter(jax.random.split(key, 64))
    params = {}
    # conv1: built as a 3-channel conv, then channels replicated i -> i % 3
    # (exactly what ResNet.__init__ does when input_shape[0] != 3).
    base_w = init_conv(next(keys), 64, 3, 7)
    if nc != 3:
        idx = jnp.array([i % 3 for i in range(nc)], dtype=jnp.int32)
        w1 = base_w[:, idx, :, :]
    else:
        w1 = base_w
    params['conv1'] = w1
    params['bn1'] = init_bn(next(keys), 64)

    inplanes = 64
    for li, (planes, stride) in enumerate(
            [(64, 1), (128, 2), (256, 2), (512, 2)], start=1):
        blocks = []
        for b in range(2):
            s = stride if b == 0 else 1
            p = {
                'conv1': init_conv(next(keys), planes, inplanes, 3),
                'bn1': init_bn(next(keys), planes),
                'conv2': init_conv(next(keys), planes, planes, 3),
                'bn2': init_bn(next(keys), planes),
            }
            if s != 1 or inplanes != planes:
                p['down_conv'] = init_conv(next(keys), planes, inplanes, 1)
                p['down_bn'] = init_bn(next(keys), planes)
            blocks.append(p)
            inplanes = planes
        params[f'layer{li}'] = blocks
    return params


# ----------------------------------------------------------------------------
# Forward pass (ResNet-18, fc = Identity, frozen BN, eval-mode dropout)
# ----------------------------------------------------------------------------
def basic_block(x, p, stride):
    identity = x
    out = conv_bn(x, p['conv1'], p['bn1'], stride, 1, relu=True)
    if 'down_conv' in p:
        identity = conv_bn(x, p['down_conv'], p['down_bn'], stride, 0,
                           relu=False)
    out = conv_bn(out, p['conv2'], p['bn2'], 1, 1, residual=identity,
                  relu=True)
    return out


def resnet18_forward(params, x_nchw):
    x = jnp.transpose(x_nchw, (0, 2, 3, 1))  # NCHW (PyTorch) -> NHWC (kernel)
    x = conv_bn(x, params['conv1'], params['bn1'], stride=2, pad=3, relu=True)
    x = maxpool_3x3_s2_p1(x)
    for name, stride in [('layer1', 1), ('layer2', 2),
                         ('layer3', 2), ('layer4', 2)]:
        blocks = params[name]
        x = basic_block(x, blocks[0], stride)
        x = basic_block(x, blocks[1], 1)
    feat = global_avgpool(x)  # (N, 512) — torch.flatten of 1x1 avgpool
    # self.network.fc = Identity()  -> no-op
    # TODO(synk): nn.Dropout is identity here (eval mode / p=0); training-mode
    # dropout would use pltpu.prng_seed + pltpu.prng_random_bits in a kernel.
    return feat


if __name__ == "__main__":
    key = jax.random.PRNGKey(0)
    kp, kx = jax.random.split(key)
    hparams = {'resnet18': True, 'resnet_dropout': 0.0}
    nc = 4  # != 3 to exercise the conv1 channel-replication path
    params = init_resnet18(kp, nc)
    x = jax.random.normal(kx, (2, nc, 16, 16), jnp.float32)  # NCHW like PyTorch
    feats = resnet18_forward(params, x)
    feats = jax.block_until_ready(feats)
    assert feats.shape == (2, 512), feats.shape       # n_outputs = 512 (resnet18)
    assert bool(jnp.all(jnp.isfinite(feats)))
    print("KERNEL_OK")
</pallas_src>

<mosaic_0001>
module attributes {stable_mosaic.version = 11 : i64} {
  func.func @_conv_bn_kernel(%arg0: i32, %arg1: memref<128x256xbf16, #tpu.memory_space<vmem>>, %arg2: memref<256x64xbf16, #tpu.memory_space<vmem>>, %arg3: memref<1x64xf32, #tpu.memory_space<vmem>>, %arg4: memref<128x64xf32, #tpu.memory_space<vmem>>) attributes {dimension_semantics = [#tpu.dimension_semantics<parallel>], iteration_bounds = array<i64: 1>, scalar_prefetch = 0 : i64, scratch_operands = 0 : i64, tpu.core_type = #tpu.core_type<tc>, window_params = [{transform_indices = @transform_0, window_bounds = array<i64: 128, 256>}, {pipeline_mode = #tpu.pipeline_mode<synchronous>, transform_indices = @transform_1, window_bounds = array<i64: 256, 64>}, {pipeline_mode = #tpu.pipeline_mode<synchronous>, transform_indices = @transform_2, window_bounds = array<i64: 1, 64>}, {transform_indices = @transform_3, window_bounds = array<i64: 128, 64>}]} {
    %c0 = arith.constant 0 : index
    %c0_0 = arith.constant 0 : index
    %0 = vector.load %arg1[%c0, %c0_0] : memref<128x256xbf16, #tpu.memory_space<vmem>>, vector<128x256xbf16>
    %c0_1 = arith.constant 0 : index
    %c0_2 = arith.constant 0 : index
    %1 = vector.load %arg2[%c0_1, %c0_2] : memref<256x64xbf16, #tpu.memory_space<vmem>>, vector<256x64xbf16>
    %cst = arith.constant dense<0.000000e+00> : vector<128x64xf32>
    %2 = tpu.matmul %0, %1, %cst {dimension_numbers = #tpu.dot_dimension_numbers<[1], [0], [0], [1], [0, 0, 1, 1], [], []>} : vector<128x256xbf16>, vector<256x64xbf16>, vector<128x64xf32> -> vector<128x64xf32>
    %c0_3 = arith.constant 0 : index
    %c0_4 = arith.constant 0 : index
    %3 = vector.load %arg3[%c0_3, %c0_4] : memref<1x64xf32, #tpu.memory_space<vmem>>, vector<1x64xf32>
    %4 = vector.broadcast %3 : vector<1x64xf32> to vector<128x64xf32>
    %5 = arith.addf %2, %4 : vector<128x64xf32>
    %cst_5 = arith.constant 0.000000e+00 : f32
    %6 = vector.broadcast %cst_5 : f32 to vector<128x64xf32>
    %7 = arith.maximumf %5, %6 : vector<128x64xf32>
    %c0_6 = arith.constant 0 : index
    %c0_7 = arith.constant 0 : index
    %8 = vector.load %arg4[%c0_6, %c0_7] : memref<128x64xf32, #tpu.memory_space<vmem>>, vector<128x64xf32>
    tpu.vector_store %arg4[%c0_6, %c0_7], %7 {strides = array<i32>} : memref<128x64xf32, #tpu.memory_space<vmem>>, vector<128x64xf32>,
    return
  }
  func.func @transform_0(%arg0: i32) -> (i32, i32) {
    %c0_i32 = arith.constant 0 : i32
    %c0_i32_0 = arith.constant 0 : i32
    return %arg0, %c0_i32 : i32, i32
  }
  func.func @transform_1(%arg0: i32) -> (i32, i32) {
    %c0_i32 = arith.constant 0 : i32
    %c0_i32_0 = arith.constant 0 : i32
    %c0_i32_1 = arith.constant 0 : i32
    return %c0_i32, %c0_i32_0 : i32, i32
  }
  func.func @transform_2(%arg0: i32) -> (i32, i32) {
    %c0_i32 = arith.constant 0 : i32
    %c0_i32_0 = arith.constant 0 : i32
    %c0_i32_1 = arith.constant 0 : i32
    return %c0_i32, %c0_i32_0 : i32, i32
  }
  func.func @transform_3(%arg0: i32) -> (i32, i32) {
    %c0_i32 = arith.constant 0 : i32
    %c0_i32_0 = arith.constant 0 : i32
    return %arg0, %c0_i32 : i32, i32
  }
}

</mosaic_0001>

<llo_original>
// kernel: tpu_custom_call.1
$region0: #{tpu_custom_call.1}
  #allocation0 [shape = 'u32[]', space=smem, size = 0x4, offset = 0x4, fixed_abs, tag = 'smem constant byte address 0x4 - core index']
  #allocation1 [shape = 'u32[72,128]{1,0:T(1,128)}', space=vmem, size = 0x9000, scoped, tag = 'internal scratch']
  %s0 = inlined_call_operand.vmem [shape: bf16[128,256], index: 0, kind: input, shape index: {}]
  %s1 = inlined_call_operand.vmem [shape: bf16[256,64], index: 1, kind: input, shape index: {}]
  %s2 = inlined_call_operand.vmem [shape: f32[1,64], index: 2, kind: input, shape index: {}]
  %s3 = inlined_call_operand.vmem [shape: f32[128,64], index: 3, kind: output, shape index: {}]
  %s4 = sld [smem:[#allocation0]]
  $region22: #{tpu_custom_call.1} parent=0
    _
  %s6 = ssub.s32 1, %s4
  %s7 = scalar_select 0, %s6, %s4
  // Predicated region
  $region2: #{tpu_custom_call.1} parent=0 // pred_check
    _
  $region3: #{tpu_custom_call.1} parent=0 // pred_check_branch
    %9 = sbr.rel (0) target = $region5
  $region4: #{tpu_custom_call.1} parent=0 // pred_region
    _
  $region5: #{tpu_custom_call.1} parent=0 // pred_fallthru
    _
  // Predicated region
  $region6: #{tpu_custom_call.1} parent=0 // pred_check
    _
  $region7: #{tpu_custom_call.1} parent=0 // pred_check_branch
    %11 = sbr.rel (0) target = $region9
  $region8: #{tpu_custom_call.1} parent=0 // pred_region
    _
  $region9: #{tpu_custom_call.1} parent=0 // pred_fallthru
    _
  // Predicated region
  $region10: #{tpu_custom_call.1} parent=0 // pred_check
    _
  $region11: #{tpu_custom_call.1} parent=0 // pred_check_branch
    %13 = sbr.rel (0) target = $region13
  $region12: #{tpu_custom_call.1} parent=0 // pred_region
    _
  $region13: #{tpu_custom_call.1} parent=0 // pred_fallthru
    _
  %v14 = vld [vmem:[%s0] sm:$0xff]
  %v15 = vld [vmem:[%s0 + $0x8] sm:$0xff]
  %v16 = vld [vmem:[%s0 + $0x10] sm:$0xff]
  %v17 = vld [vmem:[%s0 + $0x18] sm:$0xff]
  %v18 = vld [vmem:[%s0 + $0x20] sm:$0xff]
  %v19 = vld [vmem:[%s0 + $0x28] sm:$0xff]
  %v20 = vld [vmem:[%s0 + $0x30] sm:$0xff]
  %v21 = vld [vmem:[%s0 + $0x38] sm:$0xff]
  %v22 = vld [vmem:[%s0 + $0x40] sm:$0xff]
  %v23 = vld [vmem:[%s0 + $0x48] sm:$0xff]
  %v24 = vld [vmem:[%s0 + $0x50] sm:$0xff]
  %v25 = vld [vmem:[%s0 + $0x58] sm:$0xff]
  %v26 = vld [vmem:[%s0 + $0x60] sm:$0xff]
  %v27 = vld [vmem:[%s0 + $0x68] sm:$0xff]
  %v28 = vld [vmem:[%s0 + $0x70] sm:$0xff]
  %v29 = vld [vmem:[%s0 + $0x78] sm:$0xff]
  %v30 = vld [vmem:[%s1] sm:$0xf]
  %v31 = vld [vmem:[%s1 + $0x4] sm:$0xf]
  %v32 = vld [vmem:[%s1 + $0x8] sm:$0xf]
  %v33 = vld [vmem:[%s1 + $0xc] sm:$0xf]
  %v34 = vld [vmem:[%s1 + $0x10] sm:$0xf]
  %v35 = vld [vmem:[%s1 + $0x14] sm:$0xf]
  %v36 = vld [vmem:[%s1 + $0x18] sm:$0xf]
  %v37 = vld [vmem:[%s1 + $0x1c] sm:$0xf]
  %v38 = vld [vmem:[%s1 + $0x20] sm:$0xf]
  %v39 = vld [vmem:[%s1 + $0x24] sm:$0xf]
  %v40 = vld [vmem:[%s1 + $0x28] sm:$0xf]
  %v41 = vld [vmem:[%s1 + $0x2c] sm:$0xf]
  %v42 = vld [vmem:[%s1 + $0x30] sm:$0xf]
  %v43 = vld [vmem:[%s1 + $0x34] sm:$0xf]
  %v44 = vld [vmem:[%s1 + $0x38] sm:$0xf]
  %v45 = vld [vmem:[%s1 + $0x3c] sm:$0xf]
  %v46 = vld [vmem:[%s1 + $0x40] sm:$0xf]
  %v47 = vld [vmem:[%s1 + $0x44] sm:$0xf]
  %v48 = vld [vmem:[%s1 + $0x48] sm:$0xf]
  %v49 = vld [vmem:[%s1 + $0x4c] sm:$0xf]
  %v50 = vld [vmem:[%s1 + $0x50] sm:$0xf]
  %v51 = vld [vmem:[%s1 + $0x54] sm:$0xf]
  %v52 = vld [vmem:[%s1 + $0x58] sm:$0xf]
  %v53 = vld [vmem:[%s1 + $0x5c] sm:$0xf]
  %v54 = vld [vmem:[%s1 + $0x60] sm:$0xf]
  %v55 = vld [vmem:[%s1 + $0x64] sm:$0xf]
  %v56 = vld [vmem:[%s1 + $0x68] sm:$0xf]
  %v57 = vld [vmem:[%s1 + $0x6c] sm:$0xf]
  %v58 = vld [vmem:[%s1 + $0x70] sm:$0xf]
  %v59 = vld [vmem:[%s1 + $0x74] sm:$0xf]
  %v60 = vld [vmem:[%s1 + $0x78] sm:$0xf]
  %v61 = vld [vmem:[%s1 + $0x7c] sm:$0xf]
  %v62 = vld [vmem:[%s2] sm:$0x1]
  %v64 = vperm.slane %v62, 0
  %v82 = vunpack.c.l.b16 %v14
  %v83 = vunpack.c.h.b16 %v14
  %v84 = vunpack.c.l.b16 %v15
  %v85 = vunpack.c.h.b16 %v15
  %v86 = vunpack.c.l.b16 %v16
  %v87 = vunpack.c.h.b16 %v16
  %v88 = vunpack.c.l.b16 %v17
  %v89 = vunpack.c.h.b16 %v17
  %v90 = vunpack.c.l.b16 %v18
  %v91 = vunpack.c.h.b16 %v18
  %v92 = vunpack.c.l.b16 %v19
  %v93 = vunpack.c.h.b16 %v19
  %v94 = vunpack.c.l.b16 %v20
  %v95 = vunpack.c.h.b16 %v20
  %v96 = vunpack.c.l.b16 %v21
  %v97 = vunpack.c.h.b16 %v21
  %v98 = vunpack.c.l.b16 %v22
  %v99 = vunpack.c.h.b16 %v22
  %v100 = vunpack.c.l.b16 %v23
  %v101 = vunpack.c.h.b16 %v23
  %v102 = vunpack.c.l.b16 %v24
  %v103 = vunpack.c.h.b16 %v24
  %v104 = vunpack.c.l.b16 %v25
  %v105 = vunpack.c.h.b16 %v25
  %v106 = vunpack.c.l.b16 %v26
  %v107 = vunpack.c.h.b16 %v26
  %v108 = vunpack.c.l.b16 %v27
  %v109 = vunpack.c.h.b16 %v27
  %v110 = vunpack.c.l.b16 %v28
  %v111 = vunpack.c.h.b16 %v28
  %v112 = vunpack.c.l.b16 %v29
  %v113 = vunpack.c.h.b16 %v29
  %v114 = vpack.c.b16 %v84, %v82
  %v115 = vpack.c.b16 %v85, %v83
  %v116 = vpack.c.b16 %v88, %v86
  %v117 = vpack.c.b16 %v89, %v87
  %v118 = vpack.c.b16 %v92, %v90
  %v119 = vpack.c.b16 %v93, %v91
  %v120 = vpack.c.b16 %v96, %v94
  %v121 = vpack.c.b16 %v97, %v95
  %v122 = vpack.c.b16 %v100, %v98
  %v123 = vpack.c.b16 %v101, %v99
  %v124 = vpack.c.b16 %v104, %v102
  %v125 = vpack.c.b16 %v105, %v103
  %v126 = vpack.c.b16 %v108, %v106
  %v127 = vpack.c.b16 %v109, %v107
  %v128 = vpack.c.b16 %v112, %v110
  %v129 = vpack.c.b16 %v113, %v111
  %v178 = vunpack.c.l.b16 %v30
  %v179 = vunpack.c.l.b16 %v31
  %v180 = vunpack.c.l.b16 %v32
  %v181 = vunpack.c.l.b16 %v33
  %v182 = vunpack.c.l.b16 %v34
  %v183 = vunpack.c.l.b16 %v35
  %v184 = vunpack.c.l.b16 %v36
  %v185 = vunpack.c.l.b16 %v37
  %v186 = vunpack.c.l.b16 %v38
  %v187 = vunpack.c.l.b16 %v39
  %v188 = vunpack.c.l.b16 %v40
  %v189 = vunpack.c.l.b16 %v41
  %v190 = vunpack.c.l.b16 %v42
  %v191 = vunpack.c.l.b16 %v43
  %v192 = vunpack.c.l.b16 %v44
  %v193 = vunpack.c.l.b16 %v45
  %v194 = vunpack.c.l.b16 %v46
  %v195 = vunpack.c.l.b16 %v47
  %v196 = vunpack.c.l.b16 %v48
  %v197 = vunpack.c.l.b16 %v49
  %v198 = vunpack.c.l.b16 %v50
  %v199 = vunpack.c.l.b16 %v51
  %v200 = vunpack.c.l.b16 %v52
  %v201 = vunpack.c.l.b16 %v53
  %v202 = vunpack.c.l.b16 %v54
  %v203 = vunpack.c.l.b16 %v55
  %v204 = vunpack.c.l.b16 %v56
  %v205 = vunpack.c.l.b16 %v57
  %v206 = vunpack.c.l.b16 %v58
  %v207 = vunpack.c.l.b16 %v59
  %v208 = vunpack.c.l.b16 %v60
  %v209 = vunpack.c.l.b16 %v61
  %v210 = vpack.c.b16 %v179, %v178
  %v211 = vpack.c.b16 %v181, %v180
  %v212 = vpack.c.b16 %v183, %v182
  %v213 = vpack.c.b16 %v185, %v184
  %v214 = vpack.c.b16 %v187, %v186
  %v215 = vpack.c.b16 %v189, %v188
  %v216 = vpack.c.b16 %v191, %v190
  %v217 = vpack.c.b16 %v193, %v192
  %v218 = vpack.c.b16 %v195, %v194
  %v219 = vpack.c.b16 %v197, %v196
  %v220 = vpack.c.b16 %v199, %v198
  %v221 = vpack.c.b16 %v201, %v200
  %v222 = vpack.c.b16 %v203, %v202
  %v223 = vpack.c.b16 %v205, %v204
  %v224 = vpack.c.b16 %v207, %v206
  %v225 = vpack.c.b16 %v209, %v208
  %242 = vmatpush.bf16.msra.mxu0 %v217
  %243 = vmatpush.bf16.msra.mxu0 %v216
  %244 = vmatpush.bf16.msra.mxu0 %v215
  %245 = vmatpush.bf16.msra.mxu0 %v214
  %246 = vmatpush.bf16.msra.mxu0 %v213
  %247 = vmatpush.bf16.msra.mxu0 %v212
  %248 = vmatpush.bf16.msra.mxu0 %v211
  %249 = vmatpush.bf16.msra.mxu0 %v210
  %250 = vmatmul.bf16.gmra.mxu0 %v114
  %v251 = vpop.f32.mrf.mxu0
  %v252 = vadd.f32 %v64, %v251
  %v253 = vpop.f32.mrf.mxu0
  %v254 = vadd.f32 %v64, %v253
  %255 = vmatmul.bf16.gmra.mxu0 %v116
  %v256 = vpop.f32.mrf.mxu0
  %v257 = vadd.f32 %v64, %v256
  %v258 = vpop.f32.mrf.mxu0
  %v259 = vadd.f32 %v64, %v258
  %260 = vmatmul.bf16.gmra.mxu0 %v118
  %v261 = vpop.f32.mrf.mxu0
  %v262 = vadd.f32 %v64, %v261
  %v263 = vpop.f32.mrf.mxu0
  %v264 = vadd.f32 %v64, %v263
  %265 = vmatmul.bf16.gmra.mxu0 %v120
  %v266 = vpop.f32.mrf.mxu0
  %v267 = vadd.f32 %v64, %v266
  %v268 = vpop.f32.mrf.mxu0
  %v269 = vadd.f32 %v64, %v268
  %270 = vmatmul.bf16.gmra.mxu0 %v122
  %v271 = vpop.f32.mrf.mxu0
  %v272 = vadd.f32 %v64, %v271
  %v273 = vpop.f32.mrf.mxu0
  %v274 = vadd.f32 %v64, %v273
  %275 = vmatmul.bf16.gmra.mxu0 %v124
  %v276 = vpop.f32.mrf.mxu0
  %v277 = vadd.f32 %v64, %v276
  %v278 = vpop.f32.mrf.mxu0
  %v279 = vadd.f32 %v64, %v278
  %280 = vmatmul.bf16.gmra.mxu0 %v126
  %v281 = vpop.f32.mrf.mxu0
  %v282 = vadd.f32 %v64, %v281
  %v283 = vpop.f32.mrf.mxu0
  %v284 = vadd.f32 %v64, %v283
  %285 = vmatmul.bf16.gmra.mxu0 %v128
  %v286 = vpop.f32.mrf.mxu0
  %v287 = vadd.f32 %v64, %v286
  %v288 = vpop.f32.mrf.mxu0
  %v289 = vadd.f32 %v64, %v288
  %290 = vdwg.mxu0
  %291 = vmatpush.bf16.msra.mxu0 %v225
  %292 = vmatpush.bf16.msra.mxu0 %v224
  %293 = vmatpush.bf16.msra.mxu0 %v223
  %294 = vmatpush.bf16.msra.mxu0 %v222
  %295 = vmatpush.bf16.msra.mxu0 %v221
  %296 = vmatpush.bf16.msra.mxu0 %v220
  %297 = vmatpush.bf16.msra.mxu0 %v219
  %298 = vmatpush.bf16.msra.mxu0 %v218
  %299 = vmatmul.bf16.gmra.mxu0 %v115
  %v300 = vpop.f32.mrf.mxu0
  %v301 = vadd.f32 %v252, %v300
  %v302 = vpop.f32.mrf.mxu0
  %v303 = vadd.f32 %v254, %v302
  %304 = vmatmul.bf16.gmra.mxu0 %v117
  %v305 = vpop.f32.mrf.mxu0
  %v306 = vadd.f32 %v257, %v305
  %v307 = vpop.f32.mrf.mxu0
  %v308 = vadd.f32 %v259, %v307
  %309 = vmatmul.bf16.gmra.mxu0 %v119
  %v310 = vpop.f32.mrf.mxu0
  %v311 = vadd.f32 %v262, %v310
  %v312 = vpop.f32.mrf.mxu0
  %v313 = vadd.f32 %v264, %v312
  %314 = vmatmul.bf16.gmra.mxu0 %v121
  %v315 = vpop.f32.mrf.mxu0
  %v316 = vadd.f32 %v267, %v315
  %v317 = vpop.f32.mrf.mxu0
  %v318 = vadd.f32 %v269, %v317
  %319 = vmatmul.bf16.gmra.mxu0 %v123
  %v320 = vpop.f32.mrf.mxu0
  %v321 = vadd.f32 %v272, %v320
  %v322 = vpop.f32.mrf.mxu0
  %v323 = vadd.f32 %v274, %v322
  %324 = vmatmul.bf16.gmra.mxu0 %v125
  %v325 = vpop.f32.mrf.mxu0
  %v326 = vadd.f32 %v277, %v325
  %v327 = vpop.f32.mrf.mxu0
  %v328 = vadd.f32 %v279, %v327
  %329 = vmatmul.bf16.gmra.mxu0 %v127
  %v330 = vpop.f32.mrf.mxu0
  %v331 = vadd.f32 %v282, %v330
  %v332 = vpop.f32.mrf.mxu0
  %v333 = vadd.f32 %v284, %v332
  %334 = vmatmul.bf16.gmra.mxu0 %v129
  %v335 = vpop.f32.mrf.mxu0
  %v336 = vadd.f32 %v287, %v335
  %v337 = vpop.f32.mrf.mxu0
  %v338 = vadd.f32 %v289, %v337
  %339 = vdwg.mxu0
  %v340 = vmax.f32 %v301, 0.0
  %v341 = vmax.f32 %v303, 0.0
  %v342 = vmax.f32 %v306, 0.0
  %v343 = vmax.f32 %v308, 0.0
  %v344 = vmax.f32 %v311, 0.0
  %v345 = vmax.f32 %v313, 0.0
  %v346 = vmax.f32 %v316, 0.0
  %v347 = vmax.f32 %v318, 0.0
  %v348 = vmax.f32 %v321, 0.0
  %v349 = vmax.f32 %v323, 0.0
  %v350 = vmax.f32 %v326, 0.0
  %v351 = vmax.f32 %v328, 0.0
  %v352 = vmax.f32 %v331, 0.0
  %v353 = vmax.f32 %v333, 0.0
  %v354 = vmax.f32 %v336, 0.0
  %v355 = vmax.f32 %v338, 0.0
  %vm356 = vcmask 523264
  %357 = vst.msk [vmem:[%s3] sm:$0xff] %vm356, %v340
  %358 = vst.msk [vmem:[%s3 + $0x8] sm:$0xff] %vm356, %v341
  %359 = vst.msk [vmem:[%s3 + $0x10] sm:$0xff] %vm356, %v342
  %360 = vst.msk [vmem:[%s3 + $0x18] sm:$0xff] %vm356, %v343
  %361 = vst.msk [vmem:[%s3 + $0x20] sm:$0xff] %vm356, %v344
  %362 = vst.msk [vmem:[%s3 + $0x28] sm:$0xff] %vm356, %v345
  %363 = vst.msk [vmem:[%s3 + $0x30] sm:$0xff] %vm356, %v346
  %364 = vst.msk [vmem:[%s3 + $0x38] sm:$0xff] %vm356, %v347
  %365 = vst.msk [vmem:[%s3 + $0x40] sm:$0xff] %vm356, %v348
  %366 = vst.msk [vmem:[%s3 + $0x48] sm:$0xff] %vm356, %v349
  %367 = vst.msk [vmem:[%s3 + $0x50] sm:$0xff] %vm356, %v350
  %368 = vst.msk [vmem:[%s3 + $0x58] sm:$0xff] %vm356, %v351
  %369 = vst.msk [vmem:[%s3 + $0x60] sm:$0xff] %vm356, %v352
  %370 = vst.msk [vmem:[%s3 + $0x68] sm:$0xff] %vm356, %v353
  %371 = vst.msk [vmem:[%s3 + $0x70] sm:$0xff] %vm356, %v354
  %372 = vst.msk [vmem:[%s3 + $0x78] sm:$0xff] %vm356, %v355
  // Predicated region
  $region14: #{tpu_custom_call.1} parent=0 // pred_check
    _
  $region15: #{tpu_custom_call.1} parent=0 // pred_check_branch
    %374 = sbr.rel (0) target = $region17
  $region16: #{tpu_custom_call.1} parent=0 // pred_region
    _
  $region17: #{tpu_custom_call.1} parent=0 // pred_fallthru
    _
  // Predicated region
  $region18: #{tpu_custom_call.1} parent=0 // pred_check
    _
  $region19: #{tpu_custom_call.1} parent=0 // pred_check_branch
    %376 = sbr.rel (0) target = $region21
  $region20: #{tpu_custom_call.1} parent=0 // pred_region
    _
  $region21: #{tpu_custom_call.1} parent=0 // pred_fallthru
    _

</llo_original>
